<compile_context>
chip_gen: v5e
topology: v5e:2x2
jax: 0.10.0
libtpu: 0.0.40
codegen_flags: <defaults>
</compile_context>

<pallas_src>
import jax
import jax.numpy as jnp
from jax.experimental import pallas as pl
from jax.experimental.pallas import tpu as pltpu


def _identity_kernel(x_ref, o_ref):
    o_ref[...] = x_ref[...]


_SMALL_BYTES = 8 * 1024 * 1024   # single-launch path if the array easily fits in VMEM
_ROW_TILE = 1024                 # rows per grid step for the tiled (large-input) path


def pallas_identity(x):
    """Forward pass of nn.Identity (y = x) as a Pallas TPU copy kernel."""
    orig_shape = x.shape
    # Flatten to 2-D so the original last (contiguous) axis stays the lane axis.
    if x.ndim >= 2:
        x2 = x.reshape(-1, x.shape[-1])
    else:
        x2 = x.reshape(1, -1)
    M, N = x2.shape

    if x2.size * x2.dtype.itemsize <= _SMALL_BYTES:
        # Tiny input: one launch, whole array in VMEM; no grid, no per-step overhead.
        y2 = pl.pallas_call(
            _identity_kernel,
            out_shape=jax.ShapeDtypeStruct((M, N), x2.dtype),
            in_specs=[pl.BlockSpec(memory_space=pltpu.MemorySpace.VMEM)],
            out_specs=pl.BlockSpec(memory_space=pltpu.MemorySpace.VMEM),
        )(x2)
    else:
        # Large input: pipeline lane-dense row tiles through VMEM.
        tile_m = min(_ROW_TILE, M)
        y2 = pl.pallas_call(
            _identity_kernel,
            out_shape=jax.ShapeDtypeStruct((M, N), x2.dtype),
            grid=(pl.cdiv(M, tile_m),),
            in_specs=[pl.BlockSpec((tile_m, N), lambda i: (i, 0))],
            out_specs=pl.BlockSpec((tile_m, N), lambda i: (i, 0)),
            compiler_params=pltpu.CompilerParams(
                dimension_semantics=("parallel",)),
        )(x2)

    return y2.reshape(orig_shape)


if __name__ == "__main__":
    key = jax.random.PRNGKey(0)
    x = jax.random.normal(key, (2, 4, 16, 16), jnp.float32)

    out = jax.jit(pallas_identity)(x)
    out = jax.block_until_ready(out)

    assert out.shape == x.shape
    assert out.dtype == x.dtype
    assert bool(jnp.array_equal(out, x))
    print("KERNEL_OK")
</pallas_src>

<mosaic_0001>
module attributes {stable_mosaic.version = 11 : i64} {
  func.func @_identity_kernel(%arg0: memref<128x16xf32, #tpu.memory_space<vmem>>, %arg1: memref<128x16xf32, #tpu.memory_space<vmem>>) attributes {dimension_semantics = [], scalar_prefetch = 0 : i64, scratch_operands = 0 : i64, tpu.core_type = #tpu.core_type<tc>} {
    %c0 = arith.constant 0 : index
    %c0_0 = arith.constant 0 : index
    %0 = vector.load %arg0[%c0, %c0_0] : memref<128x16xf32, #tpu.memory_space<vmem>>, vector<128x16xf32>
    %c0_1 = arith.constant 0 : index
    %c0_2 = arith.constant 0 : index
    %1 = vector.load %arg1[%c0_1, %c0_2] : memref<128x16xf32, #tpu.memory_space<vmem>>, vector<128x16xf32>
    tpu.vector_store %arg1[%c0_1, %c0_2], %0 {strides = array<i32>} : memref<128x16xf32, #tpu.memory_space<vmem>>, vector<128x16xf32>,
    return
  }
}

</mosaic_0001>

<llo_original>
// kernel: pallas_identity.1
$region0: #{pallas_identity.1}
  #allocation0 [shape = 'u32[]', space=smem, size = 0x4, offset = 0x4, fixed_abs, tag = 'smem constant byte address 0x4 - core index']
  #allocation1 [shape = 'u32[72,128]{1,0:T(1,128)}', space=vmem, size = 0x9000, scoped, tag = 'internal scratch']
  %s0 = inlined_call_operand.hbm [shape: f32[128,16], index: 0, kind: input, shape index: {}]
  %s1 = inlined_call_operand.hbm [shape: f32[128,16], index: 1, kind: output, shape index: {}]
  %s2 = sld [smem:[#allocation0]]
  $region18: #{pallas_identity.1} parent=0
    _
  %s4 = ssub.s32 1, %s2
  %s5 = scalar_select 0, %s4, %s2
  $region1: #{pallas_identity.1} parent=0
    #allocation2 [shape = 'u8[65536]{0}', space=vmem, size = 0x10000, scoped, tag = 'input window, operand 0, single buffered']
    #allocation3 [shape = 's32[1]{0}', space=sflag, size = 0x4, scoped, tag = 'scoped memory for pallas_identity.1']
    #allocation4 [shape = 's32[1]{0}', space=sflag, size = 0x4, scoped, tag = 'scoped memory for pallas_identity.1']
    #allocation5 [shape = 'u8[65536]{0}', space=vmem, size = 0x10000, scoped, tag = 'output window, operand 0, single buffered']
    %6 = vsyncpa [#allocation3], 0
    %7 = vsyncpa [#allocation4], 0
    // Predicated region
    $region2: #{pallas_identity.1} parent=1 // pred_check
      _
    $region3: #{pallas_identity.1} parent=1 // pred_check_branch
      %9 = sbr.rel (0) target = $region5
    $region4: #{pallas_identity.1} parent=1 // pred_region
      %11 = vsyncadd [#allocation3], 0
      %s12 = sshll.u32 %s0, 4
      %s13 = int_to_ptr.hbm [resolvable:$true] %s12
      %s14 = sshll.u32 [#allocation2], 4
      %s15 = int_to_ptr.vmem [resolvable:$true] %s14
      %20 = dma.hbm_to_vmem [thread:$0]  %s13, 2048, %s15, [#allocation3], 128, 128, 8
    $region5: #{pallas_identity.1} parent=1 // pred_fallthru
      _
    // Predicated region
    $region6: #{pallas_identity.1} parent=1 // pred_check
      _
    $region7: #{pallas_identity.1} parent=1 // pred_check_branch
      %22 = sbr.rel (0) target = $region9
    $region8: #{pallas_identity.1} parent=1 // pred_region
      %24 = dma.done [#allocation3], 2048
    $region9: #{pallas_identity.1} parent=1 // pred_fallthru
      _
    %v25 = vld [vmem:[#allocation2] sm:$0xff]
    %v26 = vld [vmem:[#allocation2 + $0x8] sm:$0xff]
    %v27 = vld [vmem:[#allocation2 + $0x10] sm:$0xff]
    %v28 = vld [vmem:[#allocation2 + $0x18] sm:$0xff]
    %v29 = vld [vmem:[#allocation2 + $0x20] sm:$0xff]
    %v30 = vld [vmem:[#allocation2 + $0x28] sm:$0xff]
    %v31 = vld [vmem:[#allocation2 + $0x30] sm:$0xff]
    %v32 = vld [vmem:[#allocation2 + $0x38] sm:$0xff]
    %v33 = vld [vmem:[#allocation2 + $0x40] sm:$0xff]
    %v34 = vld [vmem:[#allocation2 + $0x48] sm:$0xff]
    %v35 = vld [vmem:[#allocation2 + $0x50] sm:$0xff]
    %v36 = vld [vmem:[#allocation2 + $0x58] sm:$0xff]
    %v37 = vld [vmem:[#allocation2 + $0x60] sm:$0xff]
    %v38 = vld [vmem:[#allocation2 + $0x68] sm:$0xff]
    %v39 = vld [vmem:[#allocation2 + $0x70] sm:$0xff]
    %v40 = vld [vmem:[#allocation2 + $0x78] sm:$0xff]
    %vm41 = vcmask 130048
    %42 = vst.msk [vmem:[#allocation5] sm:$0xff] %vm41, %v25
    %43 = vst.msk [vmem:[#allocation5 + $0x8] sm:$0xff] %vm41, %v26
    %44 = vst.msk [vmem:[#allocation5 + $0x10] sm:$0xff] %vm41, %v27
    %45 = vst.msk [vmem:[#allocation5 + $0x18] sm:$0xff] %vm41, %v28
    %46 = vst.msk [vmem:[#allocation5 + $0x20] sm:$0xff] %vm41, %v29
    %47 = vst.msk [vmem:[#allocation5 + $0x28] sm:$0xff] %vm41, %v30
    %48 = vst.msk [vmem:[#allocation5 + $0x30] sm:$0xff] %vm41, %v31
    %49 = vst.msk [vmem:[#allocation5 + $0x38] sm:$0xff] %vm41, %v32
    %50 = vst.msk [vmem:[#allocation5 + $0x40] sm:$0xff] %vm41, %v33
    %51 = vst.msk [vmem:[#allocation5 + $0x48] sm:$0xff] %vm41, %v34
    %52 = vst.msk [vmem:[#allocation5 + $0x50] sm:$0xff] %vm41, %v35
    %53 = vst.msk [vmem:[#allocation5 + $0x58] sm:$0xff] %vm41, %v36
    %54 = vst.msk [vmem:[#allocation5 + $0x60] sm:$0xff] %vm41, %v37
    %55 = vst.msk [vmem:[#allocation5 + $0x68] sm:$0xff] %vm41, %v38
    %56 = vst.msk [vmem:[#allocation5 + $0x70] sm:$0xff] %vm41, %v39
    %57 = vst.msk [vmem:[#allocation5 + $0x78] sm:$0xff] %vm41, %v40
    // Predicated region
    $region10: #{pallas_identity.1} parent=1 // pred_check
      _
    $region11: #{pallas_identity.1} parent=1 // pred_check_branch
      %59 = sbr.rel (0) target = $region13
    $region12: #{pallas_identity.1} parent=1 // pred_region
      %61 = vsyncadd [#allocation4], 0
      %s62 = sshll.u32 [#allocation5], 4
      %s63 = int_to_ptr.vmem [resolvable:$true] %s62
      %s64 = sshll.u32 %s1, 4
      %s65 = int_to_ptr.hbm [resolvable:$true] %s64
      %70 = dma.vmem_to_hbm [thread:$0]  %s63, 2048, %s65, [#allocation4], 128, 128, 8
    $region13: #{pallas_identity.1} parent=1 // pred_fallthru
      _
    // Predicated region
    $region14: #{pallas_identity.1} parent=1 // pred_check
      _
    $region15: #{pallas_identity.1} parent=1 // pred_check_branch
      %72 = sbr.rel (0) target = $region17
    $region16: #{pallas_identity.1} parent=1 // pred_region
      %74 = dma.done [#allocation4], 2048
    $region17: #{pallas_identity.1} parent=1 // pred_fallthru
      _
    %75 = vsyncpa [#allocation3], 1
    %76 = vsyncpa [#allocation4], 1

</llo_original>
